<compile_context>
chip_gen: v5e
topology: v5e:2x2
jax: 0.10.0
libtpu: 0.0.40
codegen_flags: <defaults>
</compile_context>

<pallas_src>
import jax
import jax.numpy as jnp
from jax.experimental import pallas as pl
from jax.experimental.pallas import tpu as pltpu


def _make_kernel(cin, cout, w_img, tile_rows):
    """One grid step = one (image, row-tile): all 4 sub-pixel phases in one GEMM."""
    tile_hw = tile_rows * w_img

    def kernel(x_ref, w_ref, b_ref, o_ref):
        # x_ref: (1, 3, Cin, (tile_rows+2)*W) bf16  [col-shift t, channel, row-flat spatial]
        # w_ref: (4*Cout, 9*Cin)              bf16  fused phase weights, K = (s, t, ci)
        # b_ref: (4*Cout, 1)                  f32   bias (replicated over the 4 phases)
        # o_ref: (1, 4*Cout, tile_rows*W)     bf16  4 phases stacked along sublanes
        slabs = []
        for s in range(3):              # row tap
            for t in range(3):          # col tap
                # slab[(s,t)][ci, i*W + j] == x_pad[ci, i + s, j + t]
                slabs.append(x_ref[0, t, :, s * w_img: s * w_img + tile_hw])
        xk9 = jnp.concatenate(slabs, axis=0)                         # (9*Cin, tile_HW)
        acc = jnp.dot(w_ref[...], xk9,
                      preferred_element_type=jnp.float32)            # (4*Cout, tile_HW)
        o_ref[0] = (acc + b_ref[...]).astype(o_ref.dtype)

    return kernel


def upsample_forward(x_nchw, weight, bias, *, scale_factor=2, transposed=False,
                     out_dtype=jnp.bfloat16, h_tiles=None):
    """Forward of Upsample(..., transposed=False).

    x_nchw: (N, Cin, H, W) float32, weight: (Cout, Cin, 3, 3) OIHW, bias: (Cout,)
    returns (N, Cout, 2H, 2W) in `out_dtype` (bf16 by default; f32 MXU accumulation).
    """
    if transposed:
        # TODO(synk): ConvTranspose2d(kernel_size=4, stride=2, padding=1) branch.
        raise NotImplementedError("transposed=True (ConvTranspose2d) is not implemented")
    assert scale_factor == 2, "phase decomposition is specialized to scale_factor=2"
    n, cin, h, w = x_nchw.shape
    cout = weight.shape[0]
    assert weight.shape == (cout, cin, 3, 3)

    # --- pick row tiling: keep blocks VMEM-friendly and give both TCs work -----------
    if h_tiles is None:
        def _tile_bytes(ht):
            tr = h // ht
            return ((3 * cin * (tr + 2) * w + (9 * cin + 4 * cout) * tr * w) * 2
                    + 4 * cout * tr * w * 4)
        h_tiles = 1
        while (h % (2 * h_tiles) == 0
               and ((h // (2 * h_tiles)) * w) % 128 == 0        # stay lane-dense
               and (h_tiles < 2 or _tile_bytes(h_tiles) > 4 * 2 ** 20)):
            h_tiles *= 2
    assert h % h_tiles == 0
    tile_rows = h // h_tiles
    tile_hw = tile_rows * w

    # --- fused phase weights: scatter row/col-summed 3x3 taps into 9-tap K -----------
    # combR[a, s, kr] = 1 iff upsampled-row tap kr of phase a reads padded original row +s
    combR = jnp.array([[[1., 0., 0.],
                        [0., 1., 1.],
                        [0., 0., 0.]],
                       [[0., 0., 0.],
                        [1., 1., 0.],
                        [0., 0., 1.]]], dtype=jnp.float32)          # (phase a, s, kr)
    wf = weight.astype(jnp.float32)
    w9 = jnp.einsum('ask,btl,oikl->aboist', combR, combR, wf)       # (2,2,Cout,Cin,3,3)
    # rows = (2a+b)*Cout + o ; cols = (s*3 + t)*Cin + ci  -- must match kernel concat.
    w9 = jnp.transpose(w9, (0, 1, 2, 4, 5, 3)).reshape(4 * cout, 9 * cin)
    w9 = w9.astype(jnp.bfloat16)

    b4 = jnp.tile(bias.astype(jnp.float32), 4).reshape(4 * cout, 1)  # phase-replicated

    # --- input glue: pad once, 3 column shifts, overlapping row tiles (2-row halo) ----
    xp = jnp.pad(x_nchw, ((0, 0), (0, 0), (1, 1), (1, 1)))           # (N,Cin,H+2,W+2)
    xs = jnp.stack([xp[:, :, :, t:t + w] for t in range(3)], axis=1)  # (N,3,Cin,H+2,W)
    xt = jnp.stack(
        [xs[:, :, :, j * tile_rows: j * tile_rows + tile_rows + 2, :]
         for j in range(h_tiles)], axis=1)                           # (N,ht,3,Cin,tr+2,W)
    xa = xt.reshape(n * h_tiles, 3, cin, (tile_rows + 2) * w).astype(jnp.bfloat16)

    # --- VMEM budget: block sizes + in-kernel intermediates, clamped v7x-safe ---------
    x_blk = 3 * cin * (tile_rows + 2) * w * 2
    o_blk = 4 * cout * tile_hw * 2
    w_blk = 4 * cout * 9 * cin * 2 + 4 * cout * 4
    interm = 9 * cin * tile_hw * 2 + 4 * cout * tile_hw * 4          # xk9 + f32 acc
    need = 2 * (x_blk + o_blk) + w_blk + 2 * interm
    vmem_limit = int(min(100 * 2 ** 20, max(32 * 2 ** 20, 4 * need)))

    kernel = _make_kernel(cin, cout, w, tile_rows)

    out = pl.pallas_call(
        kernel,
        out_shape=jax.ShapeDtypeStruct((n * h_tiles, 4 * cout, tile_hw), jnp.bfloat16),
        grid_spec=pltpu.PrefetchScalarGridSpec(
            num_scalar_prefetch=0,
            grid=(n * h_tiles,),                       # one (image, row-tile) per step
            in_specs=[
                pl.BlockSpec((1, 3, cin, (tile_rows + 2) * w), lambda g: (g, 0, 0, 0)),
                pl.BlockSpec((4 * cout, 9 * cin), lambda g: (0, 0)),   # fetched once
                pl.BlockSpec((4 * cout, 1), lambda g: (0, 0)),         # fetched once
            ],
            out_specs=pl.BlockSpec((1, 4 * cout, tile_hw), lambda g: (g, 0, 0)),
        ),
        compiler_params=pltpu.CompilerParams(
            dimension_semantics=("parallel",),         # both v7x TCs busy when N*ht >= 2
            vmem_limit_bytes=vmem_limit,
        ),
    )(xa, w9, b4)

    # --- phase interleave (now on bf16, half the bytes of the old f32 pass) -----------
    # axes: (img, row_tile, a, b, cout, i_local, j) -> (img, cout, row_tile, i_local, a, j, b)
    out = out.reshape(n, h_tiles, 2, 2, cout, tile_rows, w)
    out = jnp.transpose(out, (0, 4, 1, 5, 2, 6, 3))
    return out.reshape(n, cout, 2 * h, 2 * w).astype(out_dtype)


if __name__ == "__main__":
    key = jax.random.PRNGKey(0)
    k1, k2, k3 = jax.random.split(key, 3)

    N, CIN, COUT, H, W = 2, 4, 8, 16, 16
    x = jax.random.normal(k1, (N, CIN, H, W), jnp.float32)
    weight = 0.1 * jax.random.normal(k2, (COUT, CIN, 3, 3), jnp.float32)
    bias = 0.1 * jax.random.normal(k3, (COUT,), jnp.float32)

    fwd = jax.jit(upsample_forward)
    y = jax.block_until_ready(fwd(x, weight, bias))
    assert y.shape == (N, COUT, 2 * H, 2 * W), y.shape

    # reference: f32 XLA conv on the nearest-upsampled input
    x_up = jnp.repeat(jnp.repeat(x, 2, axis=2), 2, axis=3)
    ref = jax.lax.conv_general_dilated(
        x_up, weight, window_strides=(1, 1), padding=((1, 1), (1, 1)),
        dimension_numbers=("NCHW", "OIHW", "NCHW"))
    ref = ref + bias.reshape(1, COUT, 1, 1)

    yf = y.astype(jnp.float32)
    err = float(jnp.max(jnp.abs(yf - ref)))
    # bf16 inputs/weights/outputs with f32 accumulation -> ~1e-2 worst-case abs error.
    assert jnp.allclose(yf, ref, rtol=3e-2, atol=3e-2), err

    print("KERNEL_OK")
</pallas_src>

<mosaic_0001>
module attributes {stable_mosaic.version = 11 : i64} {
  func.func @kernel(%arg0: i32, %arg1: memref<1x3x4x160xbf16, #tpu.memory_space<vmem>>, %arg2: memref<32x36xbf16, #tpu.memory_space<vmem>>, %arg3: memref<32x1xf32, #tpu.memory_space<vmem>>, %arg4: memref<1x32x128xbf16, #tpu.memory_space<vmem>>) attributes {dimension_semantics = [#tpu.dimension_semantics<parallel>], iteration_bounds = array<i64: 4>, scalar_prefetch = 0 : i64, scratch_operands = 0 : i64, tpu.core_type = #tpu.core_type<tc>, window_params = [{transform_indices = @transform_0, window_bounds = array<i64: 1, 3, 4, 160>}, {pipeline_mode = #tpu.pipeline_mode<synchronous>, transform_indices = @transform_1, window_bounds = array<i64: 32, 36>}, {pipeline_mode = #tpu.pipeline_mode<synchronous>, transform_indices = @transform_2, window_bounds = array<i64: 32, 1>}, {transform_indices = @transform_3, window_bounds = array<i64: 1, 32, 128>}]} {
    %c0 = arith.constant 0 : index
    %c0_0 = arith.constant 0 : index
    %c0_1 = arith.constant 0 : index
    %c0_2 = arith.constant 0 : index
    %0 = vector.load %arg1[%c0, %c0_0, %c0_1, %c0_2] : memref<1x3x4x160xbf16, #tpu.memory_space<vmem>>, vector<1x1x4x128xbf16>
    %1 = vector.shape_cast %0 : vector<1x1x4x128xbf16> to vector<4x128xbf16>
    %c0_3 = arith.constant 0 : index
    %c1 = arith.constant 1 : index
    %c0_4 = arith.constant 0 : index
    %c0_5 = arith.constant 0 : index
    %2 = vector.load %arg1[%c0_3, %c1, %c0_4, %c0_5] : memref<1x3x4x160xbf16, #tpu.memory_space<vmem>>, vector<1x1x4x128xbf16>
    %3 = vector.shape_cast %2 : vector<1x1x4x128xbf16> to vector<4x128xbf16>
    %c0_6 = arith.constant 0 : index
    %c2 = arith.constant 2 : index
    %c0_7 = arith.constant 0 : index
    %c0_8 = arith.constant 0 : index
    %4 = vector.load %arg1[%c0_6, %c2, %c0_7, %c0_8] : memref<1x3x4x160xbf16, #tpu.memory_space<vmem>>, vector<1x1x4x128xbf16>
    %5 = vector.shape_cast %4 : vector<1x1x4x128xbf16> to vector<4x128xbf16>
    %c0_9 = arith.constant 0 : index
    %c0_10 = arith.constant 0 : index
    %c0_11 = arith.constant 0 : index
    %c16 = arith.constant 16 : index
    %6 = vector.load %arg1[%c0_9, %c0_10, %c0_11, %c16] : memref<1x3x4x160xbf16, #tpu.memory_space<vmem>>, vector<1x1x4x128xbf16>
    %7 = vector.shape_cast %6 : vector<1x1x4x128xbf16> to vector<4x128xbf16>
    %c0_12 = arith.constant 0 : index
    %c1_13 = arith.constant 1 : index
    %c0_14 = arith.constant 0 : index
    %c16_15 = arith.constant 16 : index
    %8 = vector.load %arg1[%c0_12, %c1_13, %c0_14, %c16_15] : memref<1x3x4x160xbf16, #tpu.memory_space<vmem>>, vector<1x1x4x128xbf16>
    %9 = vector.shape_cast %8 : vector<1x1x4x128xbf16> to vector<4x128xbf16>
    %c0_16 = arith.constant 0 : index
    %c2_17 = arith.constant 2 : index
    %c0_18 = arith.constant 0 : index
    %c16_19 = arith.constant 16 : index
    %10 = vector.load %arg1[%c0_16, %c2_17, %c0_18, %c16_19] : memref<1x3x4x160xbf16, #tpu.memory_space<vmem>>, vector<1x1x4x128xbf16>
    %11 = vector.shape_cast %10 : vector<1x1x4x128xbf16> to vector<4x128xbf16>
    %c0_20 = arith.constant 0 : index
    %c0_21 = arith.constant 0 : index
    %c0_22 = arith.constant 0 : index
    %c32 = arith.constant 32 : index
    %12 = vector.load %arg1[%c0_20, %c0_21, %c0_22, %c32] : memref<1x3x4x160xbf16, #tpu.memory_space<vmem>>, vector<1x1x4x128xbf16>
    %13 = vector.shape_cast %12 : vector<1x1x4x128xbf16> to vector<4x128xbf16>
    %c0_23 = arith.constant 0 : index
    %c1_24 = arith.constant 1 : index
    %c0_25 = arith.constant 0 : index
    %c32_26 = arith.constant 32 : index
    %14 = vector.load %arg1[%c0_23, %c1_24, %c0_25, %c32_26] : memref<1x3x4x160xbf16, #tpu.memory_space<vmem>>, vector<1x1x4x128xbf16>
    %15 = vector.shape_cast %14 : vector<1x1x4x128xbf16> to vector<4x128xbf16>
    %c0_27 = arith.constant 0 : index
    %c2_28 = arith.constant 2 : index
    %c0_29 = arith.constant 0 : index
    %c32_30 = arith.constant 32 : index
    %16 = vector.load %arg1[%c0_27, %c2_28, %c0_29, %c32_30] : memref<1x3x4x160xbf16, #tpu.memory_space<vmem>>, vector<1x1x4x128xbf16>
    %17 = vector.shape_cast %16 : vector<1x1x4x128xbf16> to vector<4x128xbf16>
    %18 = tpu.concatenate %1, %3, %5, %7, %9, %11, %13, %15, %17 in 0 : vector<4x128xbf16>, vector<4x128xbf16>, vector<4x128xbf16>, vector<4x128xbf16>, vector<4x128xbf16>, vector<4x128xbf16>, vector<4x128xbf16>, vector<4x128xbf16>, vector<4x128xbf16> -> vector<36x128xbf16>
    %c0_31 = arith.constant 0 : index
    %c0_32 = arith.constant 0 : index
    %19 = vector.load %arg2[%c0_31, %c0_32] : memref<32x36xbf16, #tpu.memory_space<vmem>>, vector<32x36xbf16>
    %cst = arith.constant dense<0.000000e+00> : vector<32x128xf32>
    %20 = tpu.matmul %19, %18, %cst {dimension_numbers = #tpu.dot_dimension_numbers<[1], [0], [0], [1], [0, 0, 1, 1], [], []>} : vector<32x36xbf16>, vector<36x128xbf16>, vector<32x128xf32> -> vector<32x128xf32>
    %c0_33 = arith.constant 0 : index
    %c0_34 = arith.constant 0 : index
    %21 = vector.load %arg3[%c0_33, %c0_34] : memref<32x1xf32, #tpu.memory_space<vmem>>, vector<32x1xf32>
    %22 = vector.broadcast %21 : vector<32x1xf32> to vector<32x128xf32>
    %23 = arith.addf %20, %22 : vector<32x128xf32>
    %24 = arith.truncf %23 : vector<32x128xf32> to vector<32x128xbf16>
    %c0_35 = arith.constant 0 : index
    %c0_36 = arith.constant 0 : index
    %c0_37 = arith.constant 0 : index
    %25 = vector.load %arg4[%c0_35, %c0_36, %c0_37] : memref<1x32x128xbf16, #tpu.memory_space<vmem>>, vector<1x32x128xbf16>
    %26 = vector.shape_cast %25 : vector<1x32x128xbf16> to vector<32x128xbf16>
    %27 = vector.shape_cast %24 : vector<32x128xbf16> to vector<1x32x128xbf16>
    tpu.vector_store %arg4[%c0_35, %c0_36, %c0_37], %27 {strides = array<i32>} : memref<1x32x128xbf16, #tpu.memory_space<vmem>>, vector<1x32x128xbf16>,
    return
  }
  func.func @transform_0(%arg0: i32) -> (i32, i32, i32, i32) {
    %c0_i32 = arith.constant 0 : i32
    %c0_i32_0 = arith.constant 0 : i32
    %c0_i32_1 = arith.constant 0 : i32
    %c0_i32_2 = arith.constant 0 : i32
    return %arg0, %c0_i32, %c0_i32_0, %c0_i32_1 : i32, i32, i32, i32
  }
  func.func @transform_1(%arg0: i32) -> (i32, i32) {
    %c0_i32 = arith.constant 0 : i32
    %c0_i32_0 = arith.constant 0 : i32
    %c0_i32_1 = arith.constant 0 : i32
    return %c0_i32, %c0_i32_0 : i32, i32
  }
  func.func @transform_2(%arg0: i32) -> (i32, i32) {
    %c0_i32 = arith.constant 0 : i32
    %c0_i32_0 = arith.constant 0 : i32
    %c0_i32_1 = arith.constant 0 : i32
    return %c0_i32, %c0_i32_0 : i32, i32
  }
  func.func @transform_3(%arg0: i32) -> (i32, i32, i32) {
    %c0_i32 = arith.constant 0 : i32
    %c0_i32_0 = arith.constant 0 : i32
    %c0_i32_1 = arith.constant 0 : i32
    return %arg0, %c0_i32, %c0_i32_0 : i32, i32, i32
  }
}

</mosaic_0001>

<llo_original>
// kernel: tile.0
$region0: #{tile.0}
  %s0 = inlined_call_operand.vmem [shape: f32[4,8], index: 0, kind: input, shape index: {}]
  %s1 = inlined_call_operand.vmem [shape: f32[32,1], index: 1, kind: output, shape index: {}]
  $region1: #{tile.0} parent=0
    #allocation0 [shape = 'u8[4096]{0}', space=vmem, size = 0x1000, scoped, tag = 'scoped mem for input reshape']
    %s3 = ssub.s32 16, 1
    %v4 = vld [vmem:[%s0] sm:%s3]
    %5 = vst [vmem:[#allocation0] sm:%s3] %v4
    %v6 = vld [vmem:[#allocation0] sm:$0xf]
    %vm7 = vcmask 7168
    %8 = vst.msk [vmem:[%s1] ss:$8 sm:$0xf] %vm7, %v6
    %v9 = vld [vmem:[#allocation0] sm:$0xf]
    %10 = vrot.lane.b32.xlu0 %v9, 127
    %v11 = vpop.permute.xlu0 %10
    %vm12 = vcmask 7168
    %s13 = scalar_lea.vmem %s1, 1
    %14 = vst.msk [vmem:[%s13] ss:$8 sm:$0xf] %vm12, %v11
    %v15 = vld [vmem:[#allocation0] sm:$0xf]
    %16 = vrot.lane.b32.xlu0 %v15, 126
    %v17 = vpop.permute.xlu0 %16
    %vm18 = vcmask 7168
    %s19 = scalar_lea.vmem %s1, 2
    %20 = vst.msk [vmem:[%s19] ss:$8 sm:$0xf] %vm18, %v17
    %v21 = vld [vmem:[#allocation0] sm:$0xf]
    %22 = vrot.lane.b32.xlu0 %v21, 125
    %v23 = vpop.permute.xlu0 %22
    %vm24 = vcmask 7168
    %s25 = scalar_lea.vmem %s1, 3
    %26 = vst.msk [vmem:[%s25] ss:$8 sm:$0xf] %vm24, %v23
    %v27 = vld [vmem:[#allocation0] sm:$0xf]
    %28 = vrot.lane.b32.xlu0 %v27, 124
    %v29 = vpop.permute.xlu0 %28
    %vm30 = vcmask 7168
    %s31 = scalar_lea.vmem %s1, 4
    %32 = vst.msk [vmem:[%s31] ss:$8 sm:$0xf] %vm30, %v29
    %v33 = vld [vmem:[#allocation0] sm:$0xf]
    %34 = vrot.lane.b32.xlu0 %v33, 123
    %v35 = vpop.permute.xlu0 %34
    %vm36 = vcmask 7168
    %s37 = scalar_lea.vmem %s1, 5
    %38 = vst.msk [vmem:[%s37] ss:$8 sm:$0xf] %vm36, %v35
    %v39 = vld [vmem:[#allocation0] sm:$0xf]
    %40 = vrot.lane.b32.xlu0 %v39, 122
    %v41 = vpop.permute.xlu0 %40
    %vm42 = vcmask 7168
    %s43 = scalar_lea.vmem %s1, 6
    %44 = vst.msk [vmem:[%s43] ss:$8 sm:$0xf] %vm42, %v41
    %v45 = vld [vmem:[#allocation0] sm:$0xf]
    %46 = vrot.lane.b32.xlu0 %v45, 121
    %v47 = vpop.permute.xlu0 %46
    %vm48 = vcmask 7168
    %s49 = scalar_lea.vmem %s1, 7
    %50 = vst.msk [vmem:[%s49] ss:$8 sm:$0xf] %vm48, %v47

// kernel: tile.8
$region0: #{tile.8}
  #allocation0 [shape = 's32[1]{0}', space=sflag, size = 0x4, scoped, tag = 'scoped memory for tile.8']
  %s0 = inlined_call_operand.vmem [shape: f32[8], index: 0, kind: input, shape index: {}]
  %s1 = inlined_call_operand.vmem [shape: f32[4,8], index: 1, kind: output, shape index: {}]
  // Predicated region
  $region2: #{tile.8} parent=0 // pred_check
    _
  $region3: #{tile.8} parent=0 // pred_check_branch
    %3 = sbr.rel (0) target = $region5
  $region4: #{tile.8} parent=0 // pred_region
    _
  $region5: #{tile.8} parent=0 // pred_fallthru
    _
  %v4 = vld [vmem:[%s0] ss:$0 sm:$0xff]
  %5 = vst [vmem:[%s1] sm:$0xf] %v4

// kernel: upsample_forward.1
$region0: #{upsample_forward.1}
  #allocation0 [shape = 'u32[]', space=smem, size = 0x4, offset = 0x4, fixed_abs, tag = 'smem constant byte address 0x4 - core index']
  #allocation1 [shape = 'u32[72,128]{1,0:T(1,128)}', space=vmem, size = 0x9000, scoped, tag = 'internal scratch']
  %s0 = inlined_call_operand.vmem [shape: bf16[4,3,4,160], index: 0, kind: input, shape index: {}]
  %s1 = inlined_call_operand.vmem [shape: bf16[32,36], index: 1, kind: input, shape index: {}]
  %s2 = inlined_call_operand.vmem [shape: f32[32,1], index: 2, kind: input, shape index: {}]
  %s3 = inlined_call_operand.vmem [shape: bf16[4,32,128], index: 3, kind: output, shape index: {}]
  %s4 = sld [smem:[#allocation0]]
  $region45: #{upsample_forward.1} parent=0
    _
  %s6 = ssub.s32 1, %s4
  %s7 = scalar_select 0, %s6, %s4
  loop: start=0, step=1, limit=6
  $region2: #{upsample_forward.1} parent=0 // loop_pre_header
    _
  $region3: #{upsample_forward.1} parent=0 // loop_header
    %s9 = sphi 0, %s13
    %p10 = scmp.ge.s32.totalorder %s9, 6
    %s19 = sphi 0, %s21
    %s22 = sphi 0, %s19
    %s23 = sphi 0, %s22
    %s39 = sphi 0, %s23
    %s43 = sphi 0, %s43
    %s45 = sphi 0, %s43
    %s46 = sphi 0, %s45
    %s60 = sphi 0, %s46
    %s64 = sphi 0, %s64
    %s66 = sphi 0, %s64
    %s67 = sphi 0, %s66
    %s81 = sphi 0, %s67
    %s87 = sphi 0, %s89
    %s90 = sphi 0, %s87
    %s91 = sphi 0, %s90
    %s107 = sphi 0, %s91
  $region4: #{upsample_forward.1} parent=0 // loop_header_branch
    %12 = sbr.rel (%p10) target = $region8
  $region5: #{upsample_forward.1} parent=0 // loop_body
    %s14 = ssub.s32 %s9, 1
    %s15 = ssub.s32 %s9, 2
    %s16 = sadd.s32 %s9, 1
    %s17 = ssub.s32 %s9, %s16
    %p18 = scmp.eq.s32.totalorder %s17, 0
    %s20 = sadd.s32 %s19, 1
    %s21 = scalar_select %p18, %s19, %s20
    %p24 = pneg %p18
    %p25 = scmp.eq.s32.totalorder %s9, 3
    %p26 = por %p24, %p25
    %p27 = scmp.ne.s32.totalorder %s19, %s22
    %p28 = scmp.eq.s32.totalorder %s9, 0
    %p29 = por %p27, %p28
    %p30 = scmp.ne.s32.totalorder %s19, %s22
    %p31 = scmp.eq.s32.totalorder %s14, 3
    %p32 = por %p30, %p31
    %p33 = scmp.ne.s32.totalorder %s22, %s23
    %p34 = scmp.eq.s32.totalorder %s14, 0
    %p35 = por %p33, %p34
    %p36 = scmp.ne.s32.totalorder %s22, %s23
    %p37 = scmp.eq.s32.totalorder %s15, 3
    %p38 = por %p36, %p37
    %p40 = scmp.ne.s32.totalorder %s23, %s39
    %p41 = scmp.eq.s32.totalorder %s15, 0
    %p42 = por %p40, %p41
    %s44 = sadd.s32 %s43, 1
    %p47 = scmp.eq.s32.totalorder %s9, 3
    %p48 = scmp.ne.s32.totalorder %s43, %s45
    %p49 = scmp.eq.s32.totalorder %s9, 0
    %p50 = por %p48, %p49
    %p51 = scmp.ne.s32.totalorder %s43, %s45
    %p52 = scmp.eq.s32.totalorder %s14, 3
    %p53 = por %p51, %p52
    %p54 = scmp.ne.s32.totalorder %s45, %s46
    %p55 = scmp.eq.s32.totalorder %s14, 0
    %p56 = por %p54, %p55
    %p57 = scmp.ne.s32.totalorder %s45, %s46
    %p58 = scmp.eq.s32.totalorder %s15, 3
    %p59 = por %p57, %p58
    %p61 = scmp.ne.s32.totalorder %s46, %s60
    %p62 = scmp.eq.s32.totalorder %s15, 0
    %p63 = por %p61, %p62
    %s65 = sadd.s32 %s64, 1
    %p68 = scmp.eq.s32.totalorder %s9, 3
    %p69 = scmp.ne.s32.totalorder %s64, %s66
    %p70 = scmp.eq.s32.totalorder %s9, 0
    %p71 = por %p69, %p70
    %p72 = scmp.ne.s32.totalorder %s64, %s66
    %p73 = scmp.eq.s32.totalorder %s14, 3
    %p74 = por %p72, %p73
    %p75 = scmp.ne.s32.totalorder %s66, %s67
    %p76 = scmp.eq.s32.totalorder %s14, 0
    %p77 = por %p75, %p76
    %p78 = scmp.ne.s32.totalorder %s66, %s67
    %p79 = scmp.eq.s32.totalorder %s15, 3
    %p80 = por %p78, %p79
    %p82 = scmp.ne.s32.totalorder %s67, %s81
    %p83 = scmp.eq.s32.totalorder %s15, 0
    %p84 = por %p82, %p83
    %s85 = ssub.s32 %s9, %s16
    %p86 = scmp.eq.s32.totalorder %s85, 0
    %s88 = sadd.s32 %s87, 1
    %s89 = scalar_select %p86, %s87, %s88
    %p92 = pneg %p86
    %p93 = scmp.eq.s32.totalorder %s9, 3
    %p94 = por %p92, %p93
    %p95 = scmp.ne.s32.totalorder %s87, %s90
    %p96 = scmp.eq.s32.totalorder %s9, 0
    %p97 = por %p95, %p96
    %p98 = scmp.ne.s32.totalorder %s87, %s90
    %p99 = scmp.eq.s32.totalorder %s14, 3
    %p100 = por %p98, %p99
    %p101 = scmp.ne.s32.totalorder %s90, %s91
    %p102 = scmp.eq.s32.totalorder %s14, 0
    %p103 = por %p101, %p102
    %p104 = scmp.ne.s32.totalorder %s90, %s91
    %p105 = scmp.eq.s32.totalorder %s15, 3
    %p106 = por %p104, %p105
    %p108 = scmp.ne.s32.totalorder %s91, %s107
    %p109 = scmp.eq.s32.totalorder %s15, 0
    %p110 = por %p108, %p109
    %p111 = scmp.le.s32.totalorder 1, %s9
    %p112 = scmp.lt.s32.totalorder %s9, 5
    %p113 = pnand %p111, %p112
    %p114 = pneg %p113
    // Predicated region
    $region9: #{upsample_forward.1} parent=5 // pred_check
      _
    $region10: #{upsample_forward.1} parent=5 // pred_check_branch
      %116 = sbr.rel (%p113) target = $region12
    $region11: #{upsample_forward.1} parent=5 // pred_region
      %s117 = ssub.s32 %s9, 1
      // Predicated region
      $region13: #{upsample_forward.1} parent=11 // pred_check
        %p118 = pneg %p56
      $region14: #{upsample_forward.1} parent=11 // pred_check_branch
        %120 = sbr.rel (%p118) target = $region16
      $region15: #{upsample_forward.1} parent=11 // pred_region
        _
      $region16: #{upsample_forward.1} parent=11 // pred_fallthru
        _
      // Predicated region
      $region17: #{upsample_forward.1} parent=11 // pred_check
        %p121 = pneg %p77
      $region18: #{upsample_forward.1} parent=11 // pred_check_branch
        %123 = sbr.rel (%p121) target = $region20
      $region19: #{upsample_forward.1} parent=11 // pred_region
        _
      $region20: #{upsample_forward.1} parent=11 // pred_fallthru
        _
    $region12: #{upsample_forward.1} parent=5 // pred_fallthru
      _
    %p124 = scmp.lt.s32.totalorder %s9, 4
    // Predicated region
    $region21: #{upsample_forward.1} parent=5 // pred_check
      %p125 = pneg %p124
    $region22: #{upsample_forward.1} parent=5 // pred_check_branch
      %127 = sbr.rel (%p125) target = $region24
    $region23: #{upsample_forward.1} parent=5 // pred_region
      // Predicated region
      $region25: #{upsample_forward.1} parent=23 // pred_check
        %p128 = pneg %p29
      $region26: #{upsample_forward.1} parent=23 // pred_check_branch
        %130 = sbr.rel (%p128) target = $region28
      $region27: #{upsample_forward.1} parent=23 // pred_region
        %p131 = scmp.lt.s32.totalorder %s9, 3
        %s132 = scalar_select %p131, %s9, 3
        %s133 = smul.addr %s132, 6
        %s134 = smul.addr %s133, 2
        %s135 = scalar_lea.vmem %s0, %s134
      $region28: #{upsample_forward.1} parent=23 // pred_fallthru
        _
    $region24: #{upsample_forward.1} parent=5 // pred_fallthru
      _
    %p136 = scmp.le.s32.totalorder 1, %s9
    %p137 = scmp.lt.s32.totalorder %s9, 5
    %p138 = pnand %p136, %p137
    %p139 = pneg %p138
    // Predicated region
    $region29: #{upsample_forward.1} parent=5 // pred_check
      _
    $region30: #{upsample_forward.1} parent=5 // pred_check_branch
      %141 = sbr.rel (%p138) target = $region32
    $region31: #{upsample_forward.1} parent=5 // pred_region
      %s142 = ssub.s32 %s9, 1
      %p143 = scmp.lt.s32.totalorder %s14, 3
      %s144 = scalar_select %p143, %s14, 3
      %s145 = smul.addr %s144, 6
      %s146 = smul.addr %s145, 2
      %s147 = scalar_lea.vmem %s0, %s146
      %p148 = pneg %p35
      %p149 = pneg %p32
      %p150 = pneg %p56
      %p151 = pneg %p53
      %p152 = pneg %p77
      %p153 = pneg %p74
      %p154 = pneg %p103
      %p155 = pneg %p100
      %p156 = scmp.lt.s32.totalorder %s14, 3
      %s157 = scalar_select %p156, %s14, 3
      %s158 = smul.addr %s157, 4
      %s159 = smul.addr %s158, 4
      %s160 = scalar_lea.vmem %s3, %s159
      %p161 = scmp.lt.s32.totalorder %s14, 3
      %s162 = scalar_select %p161, %s14, 3
      %s163 = smul.addr %s162, 6
      %s164 = smul.addr %s163, 2
      %s165 = scalar_lea.vmem %s0, %s164
      %p166 = scmp.lt.s32.totalorder %s14, 3
      %s167 = scalar_select %p166, %s14, 3
      %s168 = smul.addr %s167, 4
      %s169 = smul.addr %s168, 4
      %s170 = scalar_lea.vmem %s3, %s169
      %v172 = vld [vmem:[%s165] sm:$0x3]
      %s173 = scalar_lea.vmem %s165, 4
      %v174 = vld [vmem:[%s173] sm:$0x3]
      %s175 = scalar_lea.vmem %s165, 8
      %v176 = vld [vmem:[%s175] sm:$0x3]
      %v177 = vld [vmem:[%s165] sm:$0xf]
      %v178 = vld [vmem:[%s173] sm:$0xf]
      %v179 = vld [vmem:[%s175] sm:$0xf]
      %s181 = scalar_lea.vmem [#allocation1], 1
      %182 = vst [vmem:[%s181] ss:$4 sm:$0xff] %v174
      %v183 = vld.sshfl [vmem:[#allocation1] sm:$0xff pattern:$0x73625140]
      %s185 = scalar_lea.vmem [#allocation1], 2
      %186 = vst [vmem:[%s185] ss:$4 sm:$0xff] %v176
      %v187 = vld.sshfl [vmem:[#allocation1] sm:$0xff pattern:$0x73625140]
      %s189 = scalar_lea.vmem [#allocation1], 3
      %190 = vst [vmem:[%s189] ss:$4 sm:$0xff] %v177
      %v191 = vld.sshfl [vmem:[#allocation1] sm:$0xff pattern:$0x73625140]
      %v193 = vld.sshfl [vmem:[#allocation1 + $0x8] sm:$0xff pattern:$0x73625140]
      %195 = vrot.lane.b32.xlu0 %v191, 112
      %v196 = vpop.permute.xlu0 %195
      %197 = vrot.lane.b32.xlu0 %v193, 112
      %v198 = vpop.permute.xlu0 %197
      %vm199 = vcmask 916480
      %v200 = vsel %vm199, %v196, %v198
      %202 = vst [vmem:[#allocation1] ss:$4 sm:$0xff] %v178
      %v203 = vld.sshfl [vmem:[#allocation1] sm:$0xff pattern:$0x73625140]
      %v205 = vld.sshfl [vmem:[#allocation1 + $0x8] sm:$0xff pattern:$0x73625140]
      %207 = vrot.lane.b32.xlu0 %v203, 112
      %v208 = vpop.permute.xlu0 %207
      %209 = vrot.lane.b32.xlu0 %v205, 112
      %v210 = vpop.permute.xlu0 %209
      %v211 = vsel %vm199, %v208, %v210
      %s213 = scalar_lea.vmem [#allocation1], 1
      %214 = vst [vmem:[%s213] ss:$4 sm:$0xff] %v179
      %v215 = vld.sshfl [vmem:[#allocation1] sm:$0xff pattern:$0x73625140]
      %v217 = vld.sshfl [vmem:[#allocation1 + $0x8] sm:$0xff pattern:$0x73625140]
      %219 = vrot.lane.b32.xlu0 %v215, 112
      %v220 = vpop.permute.xlu0 %219
      %221 = vrot.lane.b32.xlu0 %v217, 112
      %v222 = vpop.permute.xlu0 %221
      %v223 = vsel %vm199, %v220, %v222
      %s224 = scalar_lea.vmem [#allocation1], 2
      %225 = vst [vmem:[%s224] ss:$4 sm:$0xff] %v177
      %v226 = vld.sshfl [vmem:[#allocation1] sm:$0xff pattern:$0x73625140]
      %v228 = vld.sshfl [vmem:[#allocation1 + $0x8] sm:$0xff pattern:$0x73625140]
      %230 = vrot.lane.b32.xlu0 %v226, 96
      %v231 = vpop.permute.xlu0 %230
      %232 = vrot.lane.b32.xlu0 %v228, 96
      %v233 = vpop.permute.xlu0 %232
      %vm234 = vcmask 785408
      %v235 = vsel %vm234, %v231, %v233
      %s236 = scalar_lea.vmem [#allocation1], 3
      %237 = vst [vmem:[%s236] ss:$4 sm:$0xff] %v178
      %v238 = vld.sshfl [vmem:[#allocation1] sm:$0xff pattern:$0x73625140]
      %v240 = vld.sshfl [vmem:[#allocation1 + $0x8] sm:$0xff pattern:$0x73625140]
      %242 = vrot.lane.b32.xlu0 %v238, 96
      %v243 = vpop.permute.xlu0 %242
      %244 = vrot.lane.b32.xlu0 %v240, 96
      %v245 = vpop.permute.xlu0 %244
      %v246 = vsel %vm234, %v243, %v245
      %247 = vst [vmem:[#allocation1] ss:$4 sm:$0xff] %v179
      %v248 = vld.sshfl [vmem:[#allocation1] sm:$0xff pattern:$0x73625140]
      %v250 = vld.sshfl [vmem:[#allocation1 + $0x8] sm:$0xff pattern:$0x73625140]
      %252 = vrot.lane.b32.xlu0 %v248, 96
      %v253 = vpop.permute.xlu0 %252
      %254 = vrot.lane.b32.xlu0 %v250, 96
      %v255 = vpop.permute.xlu0 %254
      %v256 = vsel %vm234, %v253, %v255
      %vm257 = vcmask 1041408
      %v259 = vsel %vm257, %v172, %v183
      %vm260 = vcmask 1043456
      %v261 = vsel %vm260, %v259, %v187
      %vm262 = vcmask 1045504
      %v264 = vsel %vm262, %v261, %v200
      %v268 = vsel %vm257, %v211, %v223
      %v270 = vsel %vm260, %v268, %v235
      %v272 = vsel %vm262, %v270, %v246
      %v274 = vld [vmem:[%s1] sm:$0xf]
      %v275 = vld [vmem:[%s1 + $0x4] sm:$0xf]
      %v276 = vld [vmem:[%s1 + $0x8] sm:$0xf]
      %v277 = vld [vmem:[%s1 + $0xc] sm:$0xf]
      %v278 = vld [vmem:[%s2] sm:$0xff]
      %v279 = vld [vmem:[%s2 + $0x8] sm:$0xff]
      %v280 = vld [vmem:[%s2 + $0x10] sm:$0xff]
      %v281 = vld [vmem:[%s2 + $0x18] sm:$0xff]
      %283 = vset.pattern.permute.xlu0 0
      %284 = vperm.xlu0 %283, %v278
      %v285 = vpop.permute.xlu0 %284
      %288 = vset.pattern.permute.xlu0 0
      %289 = vperm.xlu0 %288, %v279
      %v290 = vpop.permute.xlu0 %289
      %293 = vset.pattern.permute.xlu0 0
      %294 = vperm.xlu0 %293, %v280
      %v295 = vpop.permute.xlu0 %294
      %298 = vset.pattern.permute.xlu0 0
      %299 = vperm.xlu0 %298, %v281
      %v300 = vpop.permute.xlu0 %299
      %v306 = vunpack.c.l.b16 %v274
      %v307 = vunpack.c.l.b16 %v275
      %v308 = vunpack.c.l.b16 %v276
      %v309 = vunpack.c.l.b16 %v277
      %v310 = vpack.c.b16 %v307, %v306
      %v311 = vpack.c.b16 %v309, %v308
      %vm312 = vcmask 293888
      %v314 = vsel %vm312, %v310, 0
      %v317 = vsel %vm312, %v311, 0
      %v320 = vsel %vm257, %v256, 0
      %322 = vmatpush.bf16.msra.mxu0 0
      %323 = vmatpush.bf16.msra.mxu0 0
      %324 = vmatpush.bf16.msra.mxu0 0
      %325 = vmatpush.bf16.msra.mxu0 0
      %326 = vmatpush.bf16.msra.mxu0 0
      %327 = vmatpush.bf16.msra.mxu0 %v320
      %328 = vmatpush.bf16.msra.mxu0 %v272
      %329 = vmatpush.bf16.msra.mxu0 %v264
      %330 = vmatmul.bf16.gmra.mxu0 %v314
      %v331 = vpop.f32.mrf.mxu0
      %v332 = vadd.f32 %v285, %v331
      %v333 = vpop.f32.mrf.mxu0
      %v334 = vadd.f32 %v290, %v333
      %335 = vmatmul.bf16.gmra.mxu0 %v317
      %v336 = vpop.f32.mrf.mxu0
      %v337 = vadd.f32 %v295, %v336
      %v338 = vpop.f32.mrf.mxu0
      %v339 = vadd.f32 %v300, %v338
      %340 = vdwg.mxu0
      %v341 = vpack.c.bf16 %v332, %v332
      %v342 = vpack.c.bf16 %v334, %v334
      %v343 = vpack.c.bf16 %v337, %v337
      %v344 = vpack.c.bf16 %v339, %v339
      %345 = vst [vmem:[%s170] sm:$0xf] %v341
      %346 = vst [vmem:[%s170 + $0x4] sm:$0xf] %v342
      %347 = vst [vmem:[%s170 + $0x8] sm:$0xf] %v343
      %348 = vst [vmem:[%s170 + $0xc] sm:$0xf] %v344
      %p349 = scmp.lt.s32.totalorder %s14, 3
      %s350 = scalar_select %p349, %s14, 3
      %s351 = smul.addr %s350, 4
      %s352 = smul.addr %s351, 4
      %s353 = scalar_lea.vmem %s3, %s352
      // Predicated region
      $region33: #{upsample_forward.1} parent=31 // pred_check
        %p354 = pneg %p100
      $region34: #{upsample_forward.1} parent=31 // pred_check_branch
        %356 = sbr.rel (%p354) target = $region36
      $region35: #{upsample_forward.1} parent=31 // pred_region
        _
      $region36: #{upsample_forward.1} parent=31 // pred_fallthru
        _
    $region32: #{upsample_forward.1} parent=5 // pred_fallthru
      _
    %p357 = scmp.le.s32.totalorder 2, %s9
    // Predicated region
    $region37: #{upsample_forward.1} parent=5 // pred_check
      %p358 = pneg %p357
    $region38: #{upsample_forward.1} parent=5 // pred_check_branch
      %360 = sbr.rel (%p358) target = $region40
    $region39: #{upsample_forward.1} parent=5 // pred_region
      %s361 = ssub.s32 %s9, 2
      // Predicated region
      $region41: #{upsample_forward.1} parent=39 // pred_check
        %p362 = pneg %p106
      $region42: #{upsample_forward.1} parent=39 // pred_check_branch
        %364 = sbr.rel (%p362) target = $region44
      $region43: #{upsample_forward.1} parent=39 // pred_region
        %p365 = scmp.lt.s32.totalorder %s15, 3
        %s366 = scalar_select %p365, %s15, 3
        %s367 = smul.addr %s366, 4
        %s368 = smul.addr %s367, 4
        %s369 = scalar_lea.vmem %s3, %s368
      $region44: #{upsample_forward.1} parent=39 // pred_fallthru
        _
    $region40: #{upsample_forward.1} parent=5 // pred_fallthru
      _
  $region6: #{upsample_forward.1} parent=0 // loop_footer
    %s13 = sadd.s32 1, %s9
  $region7: #{upsample_forward.1} parent=0 // loop_footer_branch
    %8 = sbr.rel target = $region3
  $region8: #{upsample_forward.1} parent=0 // loop_exit
    _

</llo_original>
